<compile_context>
chip_gen: v7x
topology: tpu7x:2x2x1
jax: 0.10.0
libtpu: 0.0.40
codegen_flags: <defaults>
</compile_context>

<pallas_src>
import jax
import jax.numpy as jnp
from jax.experimental import pallas as pl
from jax.experimental.pallas import tpu as pltpu


def _vmem_capacity_bytes():
    """Per-TensorCore VMEM capacity; conservative fallback = 64 MiB (v7x)."""
    try:
        info = pltpu.get_tpu_info()
        cap = int(getattr(info, "vmem_capacity_bytes", 0) or 0)
        if cap > 0:
            return cap
    except Exception:
        pass
    return 64 * 1024 * 1024


def _make_kernel(*, C, HW, W, Bb, N, G, chan_scale):
    """Kernel over one (Bb, C*HW) block of x and y (one image per sublane row)."""
    L = HW
    has_tail = (G * Bb != N)   # last batch block is partial -> mask its rows

    def _fwd(a, k):
        # _fwd(a, k)[:, p] == a[:, (p + k) % L]  (cyclic; positions whose 3x3
        # window would wrap are always masked out by the validity mask).
        return pltpu.roll(a, shift=(L - k) % L, axis=1)

    def kernel(mask_ref, x_ref, y_ref, o_ref):
        # Channel-summed difference.  Per-channel loop so a full f32 copy of a
        # (possibly bf16) x / y block is never live — only (Bb, HW) f32 temps.
        d = None
        for c in range(C):
            xc = x_ref[:, c * HW:(c + 1) * HW].astype(jnp.float32)
            yc = y_ref[:, c * HW:(c + 1) * HW].astype(jnp.float32)
            dc = xc - yc
            d = dc if d is None else d + dc
        if chan_scale != 1.0:
            # 1-channel inputs: module replicates the channel 3x -> factor 3.
            d = d * chan_scale

        if has_tail:
            # Ragged batch tail (replaces the old jnp.pad): rows past N hold
            # whatever the clamped boundary DMA left in VMEM -> zero them with
            # a select (no NaN propagation).
            row = jax.lax.broadcasted_iota(jnp.int32, (Bb, 1), 0)
            d = jnp.where(pl.program_id(0) * Bb + row < N, d, 0.0)

        # Separable 3x3 Sobel on the flattened (h*W + w) lane axis via XLU lane
        # rotations (no unaligned slice copies).  Output anchored at the
        # top-left of each 3x3 window; invalid anchors masked below.
        dW = _fwd(d, W)
        d2W = _fwd(d, 2 * W)
        sv = d + (dW + dW) + d2W            # vertical [1, 2, 1] smooth
        dv = d - d2W                        # vertical [1, 0, -1] diff
        g1 = _fwd(sv, 2) - sv               # K1 = horiz diff of vert smooth
        dv1 = _fwd(dv, 1)
        g2 = dv + (dv1 + dv1) + _fwd(dv, 2)  # K2 = horiz [1,2,1] of vert diff

        m = mask_ref[...]                   # (1, HW): 1.0 iff h < H-2 and w < W-2
        g1 = g1 * m
        g2 = g2 * m

        # Per-block partial sums of squares; sqrt + cross-block sum happen in
        # the wrapper so the grid axis stays "parallel".
        o_ref[:, 0:1] = jnp.sum(g1 * g1, axis=(0, 1), keepdims=True)
        o_ref[:, 1:2] = jnp.sum(g2 * g2, axis=(0, 1), keepdims=True)

    return kernel


def c_contour(x, y, *, target_block_bytes=None):
    """Pallas implementation of C_contour.forward(x, y). Returns an f32 scalar."""
    assert x.shape == y.shape, (x.shape, y.shape)
    N, C, H, W = x.shape
    assert C in (1, 3), "C_contour expects 1- or 3-channel NCHW inputs"
    assert H >= 3 and W >= 3

    chan_scale = 3.0 if C == 1 else 1.0

    HW = H * W
    M = C * HW
    itemsize = jnp.dtype(x.dtype).itemsize
    per_row_in = M * itemsize                       # one image, one copy
    # 2 inputs x 2 pipeline buffers + ~12 f32 (Bb, HW) temporaries per row.
    row_bytes = 4 * per_row_in + 12 * HW * 4

    cap = _vmem_capacity_bytes()
    vmem_budget = max(min(int(cap * 0.75), cap - (16 << 20)), cap // 2)
    if target_block_bytes is None:
        # 8 MiB input blocks on 128-MiB-VMEM parts (v5e/v6e), 4 MiB on v7x.
        target_block_bytes = (8 << 20) if cap >= (96 << 20) else (4 << 20)

    max_rows_vmem = int(vmem_budget // row_bytes)
    if N <= 8:
        if N > max_rows_vmem:
            # TODO(synk): row-tiled (2-row halo) path for single images whose
            # double-buffered block + f32 temporaries exceed per-core VMEM
            # (needed for very large images, especially on v7x's 64 MiB/TC).
            raise NotImplementedError(
                "image too large for whole-image blocks; needs row-tiled path")
        Bb = N                                      # block dim == full array dim
    else:
        dma_rows = max(8, target_block_bytes // max(per_row_in, 1))
        Bb = min(max_rows_vmem, dma_rows, N)
        Bb = (Bb // 8) * 8                          # sublane-tile aligned
        if Bb < 8:
            # TODO(synk): same row-tiled halo path as above.
            raise NotImplementedError(
                "image too large for whole-image blocks; needs row-tiled path")
    G = pl.cdiv(N, Bb)

    # Declared VMEM limit tracks the estimated footprint (never exceeds the
    # per-generation budget; never clamps below the actual need).
    est = Bb * row_bytes + (2 << 20)
    vmem_limit = int(min(max(est, 32 << 20), vmem_budget))

    # Free reshape of contiguous NCHW -> lane-dense (N, C*H*W).
    x2 = x.reshape(N, M)
    y2 = y.reshape(N, M)

    # Stencil-anchor validity mask over the flattened (h*W + w) lane axis.
    lane_mask = ((jnp.arange(H)[:, None] < H - 2) &
                 (jnp.arange(W)[None, :] < W - 2)).astype(jnp.float32)
    lane_mask = lane_mask.reshape(1, HW)

    kernel = _make_kernel(C=C, HW=HW, W=W, Bb=Bb, N=N, G=G,
                          chan_scale=chan_scale)

    partials = pl.pallas_call(
        kernel,
        out_shape=jax.ShapeDtypeStruct((G, 1, 2), jnp.float32),
        grid_spec=pltpu.PrefetchScalarGridSpec(
            num_scalar_prefetch=0,
            grid=(G,),
            in_specs=[
                pl.BlockSpec((1, HW), lambda g: (0, 0)),   # validity mask
                pl.BlockSpec((Bb, M), lambda g: (g, 0)),   # x batch block
                pl.BlockSpec((Bb, M), lambda g: (g, 0)),   # y batch block
            ],
            out_specs=pl.BlockSpec((None, 1, 2), lambda g: (g, 0, 0)),
        ),
        compiler_params=pltpu.CompilerParams(
            dimension_semantics=("parallel",),
            vmem_limit_bytes=vmem_limit),
    )(lane_mask, x2, y2)

    s = jnp.sum(partials, axis=(0, 1))          # (2,) = [sum(g1^2), sum(g2^2)]
    return jnp.sqrt(s[0]) + jnp.sqrt(s[1])


def _reference(x, y):
    """Pure-JAX reference mirroring the PyTorch module exactly."""
    if x.shape[1] == 1:
        x = jnp.concatenate([x, x, x], axis=1)
    if y.shape[1] == 1:
        y = jnp.concatenate([y, y, y], axis=1)
    k1 = jnp.array([[-1., 0., 1.], [-2., 0., 2.], [-1., 0., 1.]], jnp.float32)
    k2 = jnp.array([[1., 2., 1.], [0., 0., 0.], [-1., -2., -1.]], jnp.float32)

    def conv(img, k):
        s = jnp.sum(img.astype(jnp.float32), axis=1)  # weights identical/channel
        n, h, w = s.shape
        ho, wo = h - 2, w - 2
        out = jnp.zeros((n, ho, wo), jnp.float32)
        for di in range(3):
            for dj in range(3):
                out = out + k[di, dj] * s[:, di:di + ho, dj:dj + wo]
        return out

    d1 = conv(x, k1) - conv(y, k1)
    d2 = conv(x, k2) - conv(y, k2)
    return jnp.sqrt(jnp.sum(d1 * d1)) + jnp.sqrt(jnp.sum(d2 * d2))


if __name__ == "__main__":
    key = jax.random.PRNGKey(0)
    kx, ky, kx1, ky1, kx2, ky2 = jax.random.split(key, 6)

    # 3-channel NCHW inputs (what Conv2d(3, 1, 3) expects).
    x = jax.random.normal(kx, (2, 3, 16, 16), dtype=jnp.float32)
    y = jax.random.normal(ky, (2, 3, 16, 16), dtype=jnp.float32)
    out = c_contour(x, y)
    jax.block_until_ready(out)
    ref = _reference(x, y)
    assert jnp.allclose(out, ref, rtol=1e-4, atol=1e-4), (out, ref)

    # 1-channel path (module replicates to 3 channels; kernel folds the factor
    # of 3 into the channel-summed difference instead of materializing a cat).
    x1 = jax.random.normal(kx1, (2, 1, 16, 16), dtype=jnp.float32)
    y1 = jax.random.normal(ky1, (2, 1, 16, 16), dtype=jnp.float32)
    out1 = c_contour(x1, y1)
    jax.block_until_ready(out1)
    ref1 = _reference(x1, y1)
    assert jnp.allclose(out1, ref1, rtol=1e-4, atol=1e-4), (out1, ref1)

    # Ragged batch (N not a multiple of the batch block) — exercises the
    # in-kernel tail mask that replaced the jnp.pad path.
    x2 = jax.random.normal(kx2, (10, 3, 16, 16), dtype=jnp.float32)
    y2 = jax.random.normal(ky2, (10, 3, 16, 16), dtype=jnp.float32)
    out2 = c_contour(x2, y2)
    jax.block_until_ready(out2)
    ref2 = _reference(x2, y2)
    assert jnp.allclose(out2, ref2, rtol=1e-4, atol=1e-4), (out2, ref2)

    print("KERNEL_OK")
</pallas_src>

<mosaic_0001>
module attributes {stable_mosaic.version = 11 : i64} {
  func.func @kernel(%arg0: i32, %arg1: memref<1x256xf32, #tpu.memory_space<vmem>>, %arg2: memref<2x768xf32, #tpu.memory_space<vmem>>, %arg3: memref<2x768xf32, #tpu.memory_space<vmem>>, %arg4: memref<1x1x2xf32, #tpu.memory_space<vmem>>) attributes {dimension_semantics = [#tpu.dimension_semantics<parallel>], iteration_bounds = array<i64: 1>, scalar_prefetch = 0 : i64, scratch_operands = 0 : i64, tpu.core_type = #tpu.core_type<tc>, window_params = [{pipeline_mode = #tpu.pipeline_mode<synchronous>, transform_indices = @transform_0, window_bounds = array<i64: 1, 256>}, {transform_indices = @transform_1, window_bounds = array<i64: 2, 768>}, {transform_indices = @transform_2, window_bounds = array<i64: 2, 768>}, {transform_indices = @transform_3, window_bounds = array<i64: 1, 1, 2>}]} {
    %c0 = arith.constant 0 : index
    %c0_0 = arith.constant 0 : index
    %0 = vector.load %arg2[%c0, %c0_0] : memref<2x768xf32, #tpu.memory_space<vmem>>, vector<2x256xf32>
    %c0_1 = arith.constant 0 : index
    %c0_2 = arith.constant 0 : index
    %1 = vector.load %arg3[%c0_1, %c0_2] : memref<2x768xf32, #tpu.memory_space<vmem>>, vector<2x256xf32>
    %2 = arith.subf %0, %1 : vector<2x256xf32>
    %c0_3 = arith.constant 0 : index
    %c256 = arith.constant 256 : index
    %3 = vector.load %arg2[%c0_3, %c256] : memref<2x768xf32, #tpu.memory_space<vmem>>, vector<2x256xf32>
    %c0_4 = arith.constant 0 : index
    %c256_5 = arith.constant 256 : index
    %4 = vector.load %arg3[%c0_4, %c256_5] : memref<2x768xf32, #tpu.memory_space<vmem>>, vector<2x256xf32>
    %5 = arith.subf %3, %4 : vector<2x256xf32>
    %6 = arith.addf %2, %5 : vector<2x256xf32>
    %c0_6 = arith.constant 0 : index
    %c512 = arith.constant 512 : index
    %7 = vector.load %arg2[%c0_6, %c512] : memref<2x768xf32, #tpu.memory_space<vmem>>, vector<2x256xf32>
    %c0_7 = arith.constant 0 : index
    %c512_8 = arith.constant 512 : index
    %8 = vector.load %arg3[%c0_7, %c512_8] : memref<2x768xf32, #tpu.memory_space<vmem>>, vector<2x256xf32>
    %9 = arith.subf %7, %8 : vector<2x256xf32>
    %10 = arith.addf %6, %9 : vector<2x256xf32>
    %c240_i32 = arith.constant 240 : i32
    %11 = tpu.dynamic_rotate %10 by %c240_i32 dim 1 : vector<2x256xf32>, i32 -> vector<2x256xf32>
    %c224_i32 = arith.constant 224 : i32
    %12 = tpu.dynamic_rotate %10 by %c224_i32 dim 1 : vector<2x256xf32>, i32 -> vector<2x256xf32>
    %13 = arith.addf %11, %11 : vector<2x256xf32>
    %14 = arith.addf %10, %13 : vector<2x256xf32>
    %15 = arith.addf %14, %12 : vector<2x256xf32>
    %16 = arith.subf %10, %12 : vector<2x256xf32>
    %c254_i32 = arith.constant 254 : i32
    %17 = tpu.dynamic_rotate %15 by %c254_i32 dim 1 : vector<2x256xf32>, i32 -> vector<2x256xf32>
    %18 = arith.subf %17, %15 : vector<2x256xf32>
    %c255_i32 = arith.constant 255 : i32
    %19 = tpu.dynamic_rotate %16 by %c255_i32 dim 1 : vector<2x256xf32>, i32 -> vector<2x256xf32>
    %20 = arith.addf %19, %19 : vector<2x256xf32>
    %21 = arith.addf %16, %20 : vector<2x256xf32>
    %c254_i32_9 = arith.constant 254 : i32
    %22 = tpu.dynamic_rotate %16 by %c254_i32_9 dim 1 : vector<2x256xf32>, i32 -> vector<2x256xf32>
    %23 = arith.addf %21, %22 : vector<2x256xf32>
    %c0_10 = arith.constant 0 : index
    %c0_11 = arith.constant 0 : index
    %24 = vector.load %arg1[%c0_10, %c0_11] : memref<1x256xf32, #tpu.memory_space<vmem>>, vector<1x256xf32>
    %25 = vector.broadcast %24 : vector<1x256xf32> to vector<2x256xf32>
    %26 = arith.mulf %18, %25 : vector<2x256xf32>
    %27 = vector.broadcast %24 : vector<1x256xf32> to vector<2x256xf32>
    %28 = arith.mulf %23, %27 : vector<2x256xf32>
    %29 = arith.mulf %26, %26 : vector<2x256xf32>
    %30 = vector.shape_cast %29 : vector<2x256xf32> to vector<1x2x256xf32>
    %cst = arith.constant dense<0.000000e+00> : vector<1xf32>
    %31 = vector.multi_reduction <add>, %30, %cst [1, 2] : vector<1x2x256xf32> to vector<1xf32>
    %32 = vector.shape_cast %31 : vector<1xf32> to vector<1x1x1xf32>
    %33 = vector.extract %32[0, 0, 0] : f32 from vector<1x1x1xf32>
    %34 = vector.broadcast %33 : f32 to vector<1x1xf32>
    %c0_12 = arith.constant 0 : index
    %c0_13 = arith.constant 0 : index
    %c0_14 = arith.constant 0 : index
    %35 = vector.load %arg4[%c0_12, %c0_13, %c0_14] : memref<1x1x2xf32, #tpu.memory_space<vmem>>, vector<1x1x1xf32>
    %36 = vector.shape_cast %35 : vector<1x1x1xf32> to vector<1x1xf32>
    %37 = vector.shape_cast %34 : vector<1x1xf32> to vector<1x1x1xf32>
    tpu.vector_store %arg4[%c0_12, %c0_13, %c0_14], %37 {strides = array<i32>} : memref<1x1x2xf32, #tpu.memory_space<vmem>>, vector<1x1x1xf32>,
    %38 = arith.mulf %28, %28 : vector<2x256xf32>
    %39 = vector.shape_cast %38 : vector<2x256xf32> to vector<1x2x256xf32>
    %cst_15 = arith.constant dense<0.000000e+00> : vector<1xf32>
    %40 = vector.multi_reduction <add>, %39, %cst_15 [1, 2] : vector<1x2x256xf32> to vector<1xf32>
    %41 = vector.shape_cast %40 : vector<1xf32> to vector<1x1x1xf32>
    %42 = vector.extract %41[0, 0, 0] : f32 from vector<1x1x1xf32>
    %43 = vector.broadcast %42 : f32 to vector<1x1xf32>
    %c0_16 = arith.constant 0 : index
    %c0_17 = arith.constant 0 : index
    %c1 = arith.constant 1 : index
    %44 = vector.load %arg4[%c0_16, %c0_17, %c1] : memref<1x1x2xf32, #tpu.memory_space<vmem>>, vector<1x1x1xf32>
    %45 = vector.shape_cast %44 : vector<1x1x1xf32> to vector<1x1xf32>
    %46 = vector.shape_cast %43 : vector<1x1xf32> to vector<1x1x1xf32>
    tpu.vector_store %arg4[%c0_16, %c0_17, %c1], %46 {strides = array<i32>} : memref<1x1x2xf32, #tpu.memory_space<vmem>>, vector<1x1x1xf32>,
    return
  }
  func.func @transform_0(%arg0: i32) -> (i32, i32) {
    %c0_i32 = arith.constant 0 : i32
    %c0_i32_0 = arith.constant 0 : i32
    %c0_i32_1 = arith.constant 0 : i32
    return %c0_i32, %c0_i32_0 : i32, i32
  }
  func.func @transform_1(%arg0: i32) -> (i32, i32) {
    %c0_i32 = arith.constant 0 : i32
    %c0_i32_0 = arith.constant 0 : i32
    return %arg0, %c0_i32 : i32, i32
  }
  func.func @transform_2(%arg0: i32) -> (i32, i32) {
    %c0_i32 = arith.constant 0 : i32
    %c0_i32_0 = arith.constant 0 : i32
    return %arg0, %c0_i32 : i32, i32
  }
  func.func @transform_3(%arg0: i32) -> (i32, i32, i32) {
    %c0_i32 = arith.constant 0 : i32
    %c0_i32_0 = arith.constant 0 : i32
    %c0_i32_1 = arith.constant 0 : i32
    return %arg0, %c0_i32, %c0_i32_0 : i32, i32, i32
  }
}

</mosaic_0001>

<llo_original>
// kernel: tpu_custom_call.1
$region0: #{tpu_custom_call.1}
  #allocation0 [shape = 'u32[]', space=smem, size = 0x4, offset = 0x4, fixed_abs, tag = 'smem constant byte address 0x4 - core index']
  #allocation1 [shape = 'u32[144,128]{1,0:T(1,128)}', space=vmem, size = 0x12000, scoped, tag = 'internal scratch']
  %s0 = inlined_call_operand.hbm [shape: f32[1,256], index: 0, kind: input, shape index: {}]
  %s1 = inlined_call_operand.hbm [shape: f32[2,768], index: 1, kind: input, shape index: {}]
  %s2 = inlined_call_operand.hbm [shape: f32[2,768], index: 2, kind: input, shape index: {}]
  %s3 = inlined_call_operand.hbm [shape: f32[1,1,2], index: 3, kind: output, shape index: {}]
  %s4 = sld [smem:[#allocation0]]
  $region34: #{tpu_custom_call.1} parent=0
    _
  %s6 = ssub.s32 1, %s4
  %s7 = scalar_select 0, %s6, %s4
  $region1: #{tpu_custom_call.1} parent=0
    #allocation2 [shape = 'u8[1024]{0}', space=vmem, size = 0x400, scoped, tag = 'input window, operand 0, single buffered']
    #allocation3 [shape = 's32[1]{0}', space=sflag, size = 0x4, scoped, tag = 'scoped memory for tpu_custom_call.1']
    #allocation4 [shape = 's32[1]{0}', space=sflag, size = 0x4, scoped, tag = 'scoped memory for tpu_custom_call.1']
    #allocation5 [shape = 'u8[6144]{0}', space=vmem, size = 0x1800, scoped, tag = 'input window, operand 1, single buffered']
    #allocation6 [shape = 's32[1]{0}', space=sflag, size = 0x4, scoped, tag = 'scoped memory for tpu_custom_call.1']
    #allocation7 [shape = 'u8[6144]{0}', space=vmem, size = 0x1800, scoped, tag = 'input window, operand 2, single buffered']
    #allocation8 [shape = 'u8[512]{0}', space=vmem, size = 0x400, scoped, tag = 'output window, operand 0, single buffered']
    %8 = vsyncpa [#allocation3], 0
    %9 = vsyncpa [#allocation6], 0
    %10 = vsyncpa [#allocation4], 0
    // Predicated region
    $region2: #{tpu_custom_call.1} parent=1 // pred_check
      _
    $region3: #{tpu_custom_call.1} parent=1 // pred_check_branch
      %12 = sbr.rel (0) target = $region5
    $region4: #{tpu_custom_call.1} parent=1 // pred_region
      %s14 = ssub.s32 32, 32
      %15 = vsyncadd [#allocation3], %s14
      %s17 = sshll.u32 [#allocation2], 4
      %s18 = int_to_ptr.vmem [resolvable:$true] %s17
      %20 = dma.hbm_to_vmem [thread:$0]  %s0, 32, %s18, [#allocation3]
    $region5: #{tpu_custom_call.1} parent=1 // pred_fallthru
      _
    // Predicated region
    $region6: #{tpu_custom_call.1} parent=1 // pred_check
      _
    $region7: #{tpu_custom_call.1} parent=1 // pred_check_branch
      %22 = sbr.rel (0) target = $region9
    $region8: #{tpu_custom_call.1} parent=1 // pred_region
      %s24 = ssub.s32 192, 192
      %25 = vsyncadd [#allocation6], %s24
      %s27 = sshll.u32 [#allocation5], 4
      %s28 = int_to_ptr.vmem [resolvable:$true] %s27
      %30 = dma.hbm_to_vmem [thread:$0]  %s1, 192, %s28, [#allocation6]
    $region9: #{tpu_custom_call.1} parent=1 // pred_fallthru
      _
    // Predicated region
    $region10: #{tpu_custom_call.1} parent=1 // pred_check
      _
    $region11: #{tpu_custom_call.1} parent=1 // pred_check_branch
      %32 = sbr.rel (0) target = $region13
    $region12: #{tpu_custom_call.1} parent=1 // pred_region
      %s34 = ssub.s32 192, 192
      %35 = vsyncadd [#allocation6], %s34
      %s37 = sshll.u32 [#allocation7], 4
      %s38 = int_to_ptr.vmem [resolvable:$true] %s37
      %40 = dma.hbm_to_vmem [thread:$0]  %s2, 192, %s38, [#allocation6]
    $region13: #{tpu_custom_call.1} parent=1 // pred_fallthru
      _
    // Predicated region
    $region14: #{tpu_custom_call.1} parent=1 // pred_check
      _
    $region15: #{tpu_custom_call.1} parent=1 // pred_check_branch
      %42 = sbr.rel (0) target = $region17
    $region16: #{tpu_custom_call.1} parent=1 // pred_region
      %43 = dma.done [#allocation3], 32
    $region17: #{tpu_custom_call.1} parent=1 // pred_fallthru
      _
    // Predicated region
    $region18: #{tpu_custom_call.1} parent=1 // pred_check
      _
    $region19: #{tpu_custom_call.1} parent=1 // pred_check_branch
      %45 = sbr.rel (0) target = $region21
    $region20: #{tpu_custom_call.1} parent=1 // pred_region
      %46 = dma.done [#allocation6], 192
    $region21: #{tpu_custom_call.1} parent=1 // pred_fallthru
      _
    // Predicated region
    $region22: #{tpu_custom_call.1} parent=1 // pred_check
      _
    $region23: #{tpu_custom_call.1} parent=1 // pred_check_branch
      %48 = sbr.rel (0) target = $region25
    $region24: #{tpu_custom_call.1} parent=1 // pred_region
      %49 = dma.done [#allocation6], 192
    $region25: #{tpu_custom_call.1} parent=1 // pred_fallthru
      _
    %v50 = vld [vmem:[#allocation5] sm:$0xf]
    %v51 = vld [vmem:[#allocation7] sm:$0xf]
    %v52 = vsub.f32 %v50, %v51
    %v53 = vld [vmem:[#allocation5 + $0x4] sm:$0xf]
    %v54 = vld [vmem:[#allocation7 + $0x4] sm:$0xf]
    %v55 = vsub.f32 %v53, %v54
    %v56 = vadd.f32 %v52, %v55
    %v57 = vld [vmem:[#allocation5 + $0x8] sm:$0xf]
    %v58 = vld [vmem:[#allocation7 + $0x8] sm:$0xf]
    %v59 = vsub.f32 %v57, %v58
    %v60 = vadd.f32 %v56, %v59
    %v63 = vunpack.c.l.s4 1983009808
    %v64 = vunpack.c.0.s8 %v63
    %v65 = vlaneseq
    %v66 = vshrl.u32 %v65, 7
    %v67 = vsub.s32 %v64, %v66
    %v68 = vrot.slane %v60, %v67
    %v69 = vcombine.high %v68, %v68
    %72 = vrot.lane.b32.xlu0 %v68, 112
    %v73 = vpop.permute.xlu0 %72
    %74 = vrot.lane.b32.xlu0 %v69, 112
    %v75 = vpop.permute.xlu0 %74
    %v76 = vlaneseq
    %v77 = vand.u32 %v76, 127
    %vm78 = vcmp.lt.s32.totalorder %v77, 112
    %v79 = vsel %vm78, %v73, %v75
    %v80 = vsel %vm78, %v75, %v73
    %81 = vrot.lane.b32.xlu0 %v68, 96
    %v82 = vpop.permute.xlu0 %81
    %83 = vrot.lane.b32.xlu0 %v69, 96
    %v84 = vpop.permute.xlu0 %83
    %vm85 = vcmp.lt.s32.totalorder %v77, 96
    %v86 = vsel %vm85, %v82, %v84
    %v87 = vsel %vm85, %v84, %v82
    %v88 = vadd.f32 %v79, %v79
    %v89 = vadd.f32 %v80, %v80
    %v92 = vcombine.low %v88, %v89
    %v94 = vunpack.c.l.s4 1983009808
    %v95 = vunpack.c.0.s8 %v94
    %v96 = vlaneseq
    %v97 = vshrl.u32 %v96, 7
    %v98 = vsub.s32 %v95, %v97
    %v99 = vrot.slane %v92, %v98
    %v101 = vadd.f32 %v60, %v99
    %v104 = vcombine.low %v86, %v87
    %v106 = vunpack.c.l.s4 1983009808
    %v107 = vunpack.c.0.s8 %v106
    %v108 = vlaneseq
    %v109 = vshrl.u32 %v108, 7
    %v110 = vsub.s32 %v107, %v109
    %v111 = vrot.slane %v104, %v110
    %v113 = vadd.f32 %v101, %v111
    %v114 = vsub.f32 %v60, %v111
    %v117 = vunpack.c.l.s4 1983009808
    %v118 = vunpack.c.0.s8 %v117
    %v119 = vlaneseq
    %v120 = vshrl.u32 %v119, 7
    %v121 = vsub.s32 %v118, %v120
    %v122 = vrot.slane %v113, %v121
    %v123 = vcombine.high %v122, %v122
    %126 = vrot.lane.b32.xlu0 %v122, 126
    %v127 = vpop.permute.xlu0 %126
    %128 = vrot.lane.b32.xlu0 %v123, 126
    %v129 = vpop.permute.xlu0 %128
    %vm130 = vcmp.lt.s32.totalorder %v77, 126
    %v131 = vsel %vm130, %v127, %v129
    %v132 = vsel %vm130, %v129, %v127
    %v133 = vsub.f32 %v131, %v122
    %v134 = vsub.f32 %v132, %v123
    %v137 = vunpack.c.l.s4 1983009808
    %v138 = vunpack.c.0.s8 %v137
    %v139 = vlaneseq
    %v140 = vshrl.u32 %v139, 7
    %v141 = vsub.s32 %v138, %v140
    %v142 = vrot.slane %v114, %v141
    %v143 = vcombine.high %v142, %v142
    %146 = vrot.lane.b32.xlu0 %v142, 127
    %v147 = vpop.permute.xlu0 %146
    %148 = vrot.lane.b32.xlu0 %v143, 127
    %v149 = vpop.permute.xlu0 %148
    %vm150 = vcmp.lt.s32.totalorder %v77, 127
    %v151 = vsel %vm150, %v147, %v149
    %v152 = vsel %vm150, %v149, %v147
    %v153 = vadd.f32 %v151, %v151
    %v154 = vadd.f32 %v152, %v152
    %v157 = vcombine.low %v153, %v154
    %v159 = vunpack.c.l.s4 1983009808
    %v160 = vunpack.c.0.s8 %v159
    %v161 = vlaneseq
    %v162 = vshrl.u32 %v161, 7
    %v163 = vsub.s32 %v160, %v162
    %v164 = vrot.slane %v157, %v163
    %v166 = vadd.f32 %v114, %v164
    %167 = vrot.lane.b32.xlu0 %v142, 126
    %v168 = vpop.permute.xlu0 %167
    %169 = vrot.lane.b32.xlu0 %v143, 126
    %v170 = vpop.permute.xlu0 %169
    %v171 = vsel %vm130, %v168, %v170
    %v172 = vsel %vm130, %v170, %v168
    %v175 = vcombine.low %v171, %v172
    %v177 = vunpack.c.l.s4 1983009808
    %v178 = vunpack.c.0.s8 %v177
    %v179 = vlaneseq
    %v180 = vshrl.u32 %v179, 7
    %v181 = vsub.s32 %v178, %v180
    %v182 = vrot.slane %v175, %v181
    %v184 = vadd.f32 %v166, %v182
    %v185 = vld [vmem:[#allocation2] sm:$0x3]
    %v187 = vlaneseq
    %v188 = vshrl.u32 %v187, 7
    %v189 = vsub.s32 0, %v188
    %v190 = vrot.slane %v185, %v189
    %v191 = vlaneseq
    %v192 = vshrl.u32 %v191, 7
    %v193 = vsub.s32 1, %v192
    %v194 = vrot.slane %v185, %v193
    %v197 = vmul.f32 %v133, %v190
    %v198 = vmul.f32 %v134, %v194
    %v199 = vcombine.low %v190, %v194
    %v201 = vunpack.c.l.s4 1983009808
    %v202 = vunpack.c.0.s8 %v201
    %v203 = vlaneseq
    %v204 = vshrl.u32 %v203, 7
    %v205 = vsub.s32 %v202, %v204
    %v206 = vrot.slane %v199, %v205
    %v208 = vmul.f32 %v184, %v206
    %v209 = vmul.f32 %v197, %v197
    %v210 = vmul.f32 %v198, %v198
    %vm211 = vcmask 1041408
    %v212 = vsel %vm211, %v209, 0.0
    %v213 = vsel %vm211, %v210, 0.0
    %v214 = vadd.f32 %v212, %v213
    %215 = vadd.xlane.f32.xlu0 %v214
    %v216 = vpop.xlane.xlu0 %215
    %v217 = vrot.slane %v216, 4
    %v218 = vadd.f32 %v216, %v217
    %v219 = vrot.slane %v218, 2
    %v220 = vadd.f32 %v218, %v219
    %v221 = vrot.slane %v220, 1
    %v222 = vadd.f32 %v220, %v221
    %s223 = vtos %v222
    %v224 = vstv %s223
    %vm225 = vcmask 0
    %226 = vst.msk [vmem:[#allocation8] sm:$0x1] %vm225, %v224
    %v227 = vmul.f32 %v208, %v208
    %v230 = vunpack.c.l.s4 1983009808
    %v231 = vunpack.c.0.s8 %v230
    %v232 = vlaneseq
    %v233 = vshrl.u32 %v232, 7
    %v234 = vsub.s32 %v231, %v233
    %v235 = vrot.slane %v227, %v234
    %v236 = vcombine.high %v235, %v235
    %v239 = vsel %vm211, %v235, 0.0
    %v240 = vsel %vm211, %v236, 0.0
    %v241 = vadd.f32 %v239, %v240
    %242 = vadd.xlane.f32.xlu0 %v241
    %v243 = vpop.xlane.xlu0 %242
    %v244 = vrot.slane %v243, 4
    %v245 = vadd.f32 %v243, %v244
    %v246 = vrot.slane %v245, 2
    %v247 = vadd.f32 %v245, %v246
    %v248 = vrot.slane %v247, 1
    %v249 = vadd.f32 %v247, %v248
    %s250 = vtos %v249
    %v251 = vstv %s250
    %vm252 = vcmask 8200
    %253 = vst.msk [vmem:[#allocation8] sm:$0x1] %vm252, %v251
    // Predicated region
    $region26: #{tpu_custom_call.1} parent=1 // pred_check
      _
    $region27: #{tpu_custom_call.1} parent=1 // pred_check_branch
      %255 = sbr.rel (0) target = $region29
    $region28: #{tpu_custom_call.1} parent=1 // pred_region
      %s257 = ssub.s32 16, 16
      %258 = vsyncadd [#allocation4], %s257
      %s260 = sshll.u32 [#allocation8], 4
      %s261 = int_to_ptr.vmem [resolvable:$true] %s260
      %263 = dma.vmem_to_hbm [thread:$0]  %s261, 16, %s3, [#allocation4]
    $region29: #{tpu_custom_call.1} parent=1 // pred_fallthru
      _
    // Predicated region
    $region30: #{tpu_custom_call.1} parent=1 // pred_check
      _
    $region31: #{tpu_custom_call.1} parent=1 // pred_check_branch
      %265 = sbr.rel (0) target = $region33
    $region32: #{tpu_custom_call.1} parent=1 // pred_region
      %266 = dma.done [#allocation4], 16
    $region33: #{tpu_custom_call.1} parent=1 // pred_fallthru
      _
    %267 = vsyncpa [#allocation3], 1
    %268 = vsyncpa [#allocation6], 1
    %269 = vsyncpa [#allocation4], 1

</llo_original>
